<compile_context>
chip_gen: v7x
topology: tpu7x:2x2x1
jax: 0.10.0
libtpu: 0.0.40
codegen_flags: <defaults>
</compile_context>

<pallas_src>
import functools

import jax
import jax.numpy as jnp
from jax.experimental import pallas as pl
from jax.experimental.pallas import tpu as pltpu

BN_EPS = 1e-5
# bf16 MXU inputs (f32 accumulation / BN stats). ~2x MXU rate on v6e/v7x and
# the largest relative win on v5e; halves weight HBM->VMEM traffic.
MATMUL_DTYPE = jnp.bfloat16


def _round_up(x, m):
    return ((x + m - 1) // m) * m


def _full_spec(shape):
    # Whole array as one VMEM-resident block (gridless calls).
    return pl.BlockSpec(shape, lambda: tuple(0 for _ in shape),
                        memory_space=pltpu.VMEM)


# ---------------------------------------------------------------------------
# Kernels
# ---------------------------------------------------------------------------
def _mlp_layer_kernel(x_ref, w0_ref, wm_ref, bn_ref, wo_ref, bo_ref, o_ref,
                      h_ref, *, eps):
    """One grid step = one layer.

    l == 0              : h = relu(BN(x @ W0))
    0 < l < last        : h = relu(BN(h @ Wmid[l-1]))      (Wmid streamed)
    l == last           : out = h @ Wout + bout
    The activation h persists in VMEM scratch across grid steps.
    """
    l = pl.program_id(0)
    last = pl.num_programs(0) - 1

    def bn_relu(y):
        # Training-mode BatchNorm1d, single-pass (biased) batch statistics.
        mean = jnp.mean(y, axis=0, keepdims=True)            # (1, dp_hid)
        mean_sq = jnp.mean(y * y, axis=0, keepdims=True)
        var = mean_sq - mean * mean
        bnp = bn_ref[0]                                       # (2, dp_hid)
        gamma = bnp[0:1, :]
        beta = bnp[1:2, :]
        scale = gamma * jax.lax.rsqrt(var + eps)              # rsqrt -> EUP
        shift = beta - mean * scale
        # Padded features have gamma=beta=0 -> stay exactly 0 through this.
        return jnp.maximum(y * scale + shift, 0.0)

    @pl.when(l == 0)
    def _():
        y = jnp.dot(x_ref[...].astype(MATMUL_DTYPE), w0_ref[...],
                    preferred_element_type=jnp.float32)
        h_ref[...] = bn_relu(y)

    @pl.when(jnp.logical_and(l > 0, l < last))
    def _():
        y = jnp.dot(h_ref[...].astype(MATMUL_DTYPE), wm_ref[0],
                    preferred_element_type=jnp.float32)
        h_ref[...] = bn_relu(y)

    @pl.when(l == last)
    def _():
        y = jnp.dot(h_ref[...].astype(MATMUL_DTYPE), wo_ref[...],
                    preferred_element_type=jnp.float32)
        o_ref[...] = (y + bo_ref[...]).astype(o_ref.dtype)


def _linear_kernel(x_ref, w_ref, b_ref, o_ref):
    y = jnp.dot(x_ref[...].astype(MATMUL_DTYPE), w_ref[...],
                preferred_element_type=jnp.float32)
    o_ref[...] = (y + b_ref[...]).astype(o_ref.dtype)


# ---------------------------------------------------------------------------
# One-time parameter preparation (padding / stacking hoisted off the hot path)
# ---------------------------------------------------------------------------
def prepare_mlp1_params(params, num_layers):
    """Pad + stack parameters once. Returns a pytree consumed by mlp1_forward."""
    if num_layers == 1:
        w, b = params["linears"][0]
        d_in, d_out = w.shape
        dp_in, dp_out = _round_up(d_in, 128), _round_up(d_out, 128)
        w_p = jnp.zeros((dp_in, dp_out), MATMUL_DTYPE).at[:d_in, :d_out].set(
            w.astype(MATMUL_DTYPE))
        b_p = jnp.zeros((1, dp_out), jnp.float32).at[0, :d_out].set(b)
        return {"num_layers": 1, "d_in": d_in, "d_out": d_out,
                "dp_in": dp_in, "dp_out": dp_out, "w": w_p, "b": b_p}

    num_hidden = num_layers - 1
    num_middle = num_layers - 2
    w0, _ = params["linears"][0]
    d_in, d_hid = w0.shape
    d_out = params["linears"][-1][0].shape[1]
    dp_in = _round_up(d_in, 128)
    dp_hid = _round_up(d_hid, 128)
    dp_out = _round_up(d_out, 128)

    # First hidden layer weight: (dp_in, dp_hid), bf16, zero-padded.
    w0_p = jnp.zeros((dp_in, dp_hid), MATMUL_DTYPE).at[:d_in, :d_hid].set(
        w0.astype(MATMUL_DTYPE))

    # Middle hidden layer weights stacked: (num_middle, dp_hid, dp_hid), bf16.
    # (Dummy single zero block if there are no middle layers, so the streamed
    # BlockSpec stays well-formed.)
    nm_eff = max(num_middle, 1)
    wm = jnp.zeros((nm_eff, dp_hid, dp_hid), MATMUL_DTYPE)
    for i in range(num_middle):
        w, _ = params["linears"][1 + i]
        wm = wm.at[i, :d_hid, :d_hid].set(w.astype(MATMUL_DTYPE))

    # Packed gamma/beta per hidden layer (f32; padded features = 0 -> exact).
    bn = jnp.zeros((num_hidden, 2, dp_hid), jnp.float32)
    for i in range(num_hidden):
        gamma, beta = params["bns"][i]
        bn = bn.at[i, 0, :d_hid].set(gamma)
        bn = bn.at[i, 1, :d_hid].set(beta)

    # Final linear (with bias).
    wo, bo = params["linears"][-1]
    wo_p = jnp.zeros((dp_hid, dp_out), MATMUL_DTYPE).at[:d_hid, :d_out].set(
        wo.astype(MATMUL_DTYPE))
    bo_p = jnp.zeros((1, dp_out), jnp.float32).at[0, :d_out].set(bo)

    return {"num_layers": num_layers, "d_in": d_in, "d_hid": d_hid,
            "d_out": d_out, "dp_in": dp_in, "dp_hid": dp_hid, "dp_out": dp_out,
            "w0": w0_p, "wm": wm, "bn": bn, "wo": wo_p, "bo": bo_p}


# ---------------------------------------------------------------------------
# Forward wrappers
# ---------------------------------------------------------------------------
def _linear_forward(prepped, x):
    n = x.shape[0]
    dp_in, dp_out = prepped["dp_in"], prepped["dp_out"]
    x_p = jnp.zeros((n, dp_in), jnp.float32).at[:, :prepped["d_in"]].set(x)
    out = pl.pallas_call(
        _linear_kernel,
        out_shape=jax.ShapeDtypeStruct((n, dp_out), jnp.float32),
        in_specs=[_full_spec((n, dp_in)), _full_spec((dp_in, dp_out)),
                  _full_spec((1, dp_out))],
        out_specs=_full_spec((n, dp_out)),
    )(x_p, prepped["w"], prepped["b"])
    return out[:, :prepped["d_out"]]


def mlp1_forward(prepped, x):
    """MLP1 forward from prepared (padded/stacked) params."""
    if prepped["num_layers"] == 1:
        return _linear_forward(prepped, x)

    num_layers = prepped["num_layers"]
    num_hidden = num_layers - 1
    n = x.shape[0]
    dp_in, dp_hid, dp_out = prepped["dp_in"], prepped["dp_hid"], prepped["dp_out"]
    nm_eff = prepped["wm"].shape[0]

    # Only per-call data movement: zero-pad x to lane width (batch not padded,
    # BN statistics must use the real batch rows).
    x_p = jnp.zeros((n, dp_in), jnp.float32).at[:, :prepped["d_in"]].set(x)

    kernel = functools.partial(_mlp_layer_kernel, eps=BN_EPS)

    # Advisory cost estimate for XLA's scheduler.
    flops = 2 * n * (dp_in * dp_hid
                     + (num_layers - 2) * dp_hid * dp_hid
                     + dp_hid * dp_out)
    bytes_accessed = (x_p.size * 4 + prepped["w0"].size * 2
                      + prepped["wm"].size * 2 + prepped["bn"].size * 4
                      + prepped["wo"].size * 2 + prepped["bo"].size * 4
                      + n * dp_out * 4)
    cost = pl.CostEstimate(flops=flops, transcendentals=num_hidden * dp_hid,
                           bytes_accessed=bytes_accessed)

    # VMEM residency: resident blocks once + streamed blocks double-buffered.
    resident = (n * dp_in * 4 + dp_in * dp_hid * 2 + dp_hid * dp_out * 2
                + dp_out * 4 + n * dp_out * 4 + n * dp_hid * 4)
    streamed = 2 * (dp_hid * dp_hid * 2 + 2 * dp_hid * 4)
    need = resident + streamed
    vmem_limit = None
    if need > 12 * 1024 * 1024:
        # Leave headroom; never request all of v7x's 64 MiB physical VMEM.
        vmem_limit = min(int(need * 1.5) + (1 << 20), 48 * 1024 * 1024)

    out_p = pl.pallas_call(
        kernel,
        out_shape=jax.ShapeDtypeStruct((n, dp_out), jnp.float32),
        grid_spec=pltpu.PrefetchScalarGridSpec(
            num_scalar_prefetch=0,
            grid=(num_layers,),            # num_hidden layers + final linear
            in_specs=[
                # x: resident across all steps.
                pl.BlockSpec((n, dp_in), lambda l: (0, 0)),
                # first-layer weight: resident (fetched once).
                pl.BlockSpec((dp_in, dp_hid), lambda l: (0, 0)),
                # middle-layer weights: streamed one block per step,
                # double-buffered by the pipeline (clamped index).
                pl.BlockSpec(
                    (1, dp_hid, dp_hid),
                    lambda l: (jnp.minimum(jnp.maximum(l - 1, 0), nm_eff - 1),
                               0, 0)),
                # per-layer gamma/beta: streamed (clamped index).
                pl.BlockSpec(
                    (1, 2, dp_hid),
                    lambda l: (jnp.minimum(l, num_hidden - 1), 0, 0)),
                # final-layer weight + bias: resident.
                pl.BlockSpec((dp_hid, dp_out), lambda l: (0, 0)),
                pl.BlockSpec((1, dp_out), lambda l: (0, 0)),
            ],
            out_specs=pl.BlockSpec((n, dp_out), lambda l: (0, 0)),
            scratch_shapes=[pltpu.VMEM((n, dp_hid), jnp.float32)],  # h
        ),
        compiler_params=pltpu.CompilerParams(
            dimension_semantics=("arbitrary",),   # h carries across steps
            vmem_limit_bytes=vmem_limit),
        cost_estimate=cost,
    )(x_p, prepped["w0"], prepped["wm"], prepped["bn"],
      prepped["wo"], prepped["bo"])

    return out_p[:, :prepped["d_out"]]


# ---------------------------------------------------------------------------
# MLP1 parameters (deterministic, PyTorch-style init; weights as (D_in, D_out))
# ---------------------------------------------------------------------------
def init_mlp1_params(key, num_layers, input_dim, hidden_dim, output_dim):
    params = {"linears": [], "bns": []}
    if num_layers == 1:
        dims = [(input_dim, output_dim)]
    else:
        dims = [(input_dim, hidden_dim)]
        dims += [(hidden_dim, hidden_dim)] * (num_layers - 2)
        dims += [(hidden_dim, output_dim)]

    for fan_in, fan_out in dims:
        key, kw, kb = jax.random.split(key, 3)
        bound = 1.0 / jnp.sqrt(jnp.float32(fan_in))
        w = jax.random.uniform(kw, (fan_in, fan_out), jnp.float32, -bound, bound)
        b = jax.random.uniform(kb, (fan_out,), jnp.float32, -bound, bound)
        params["linears"].append((w, b))

    for _ in range(max(num_layers - 1, 0)):
        params["bns"].append((jnp.ones((hidden_dim,), jnp.float32),
                              jnp.zeros((hidden_dim,), jnp.float32)))
    return params


# ---------------------------------------------------------------------------
# Pure-JAX f32 reference (with hidden biases, unfused, unpadded) for checking
# ---------------------------------------------------------------------------
def mlp1_forward_ref(params, x, num_layers):
    if num_layers == 1:
        w, b = params["linears"][0]
        return x @ w + b
    h = x
    for i in range(num_layers - 1):
        w, b = params["linears"][i]
        gamma, beta = params["bns"][i]
        y = h @ w + b
        mean = jnp.mean(y, axis=0, keepdims=True)
        var = jnp.mean((y - mean) ** 2, axis=0, keepdims=True)
        y = (y - mean) / jnp.sqrt(var + BN_EPS) * gamma + beta
        h = jnp.maximum(y, 0.0)
    w, b = params["linears"][-1]
    return h @ w + b


if __name__ == "__main__":
    num_layers = 3
    batch = 8            # multiple of 8 -> sublane-dense, unmasked stores
    input_dim = 16
    hidden_dim = 32
    output_dim = 8

    key = jax.random.PRNGKey(0)
    kx, kp = jax.random.split(key)
    x = jax.random.normal(kx, (batch, input_dim), jnp.float32)
    params = init_mlp1_params(kp, num_layers, input_dim, hidden_dim, output_dim)

    # One-time padding / stacking (off the per-forward hot path).
    prepped = prepare_mlp1_params(params, num_layers)

    out = mlp1_forward(prepped, x)
    out = jax.block_until_ready(out)

    ref = mlp1_forward_ref(params, x, num_layers)
    assert out.shape == (batch, output_dim)
    # bf16 MXU inputs -> loosened tolerance vs the f32 reference.
    assert jnp.allclose(out, ref, atol=5e-2, rtol=5e-2), (
        f"mismatch vs reference, max abs err {jnp.max(jnp.abs(out - ref))}")

    # Also exercise the num_layers == 1 (single Linear) path.
    params1 = init_mlp1_params(kp, 1, input_dim, hidden_dim, output_dim)
    prepped1 = prepare_mlp1_params(params1, 1)
    out1 = jax.block_until_ready(mlp1_forward(prepped1, x))
    ref1 = mlp1_forward_ref(params1, x, 1)
    assert jnp.allclose(out1, ref1, atol=5e-2, rtol=5e-2), "linear path mismatch"

    print("KERNEL_OK")
</pallas_src>

<mosaic_0001>
module attributes {stable_mosaic.version = 11 : i64} {
  func.func @_mlp_layer_kernel(%arg0: i32, %arg1: memref<8x128xf32, #tpu.memory_space<vmem>>, %arg2: memref<128x128xbf16, #tpu.memory_space<vmem>>, %arg3: memref<1x128x128xbf16, #tpu.memory_space<vmem>>, %arg4: memref<1x2x128xf32, #tpu.memory_space<vmem>>, %arg5: memref<128x128xbf16, #tpu.memory_space<vmem>>, %arg6: memref<1x128xf32, #tpu.memory_space<vmem>>, %arg7: memref<8x128xf32, #tpu.memory_space<vmem>>, %arg8: memref<8x128xf32, #tpu.memory_space<vmem>>) attributes {dimension_semantics = [#tpu.dimension_semantics<arbitrary>], iteration_bounds = array<i64: 3>, scalar_prefetch = 0 : i64, scratch_operands = 1 : i64, tpu.core_type = #tpu.core_type<tc>, window_params = [{pipeline_mode = #tpu.pipeline_mode<synchronous>, transform_indices = @transform_0, window_bounds = array<i64: 8, 128>}, {pipeline_mode = #tpu.pipeline_mode<synchronous>, transform_indices = @transform_1, window_bounds = array<i64: 128, 128>}, {transform_indices = @transform_2, window_bounds = array<i64: 1, 128, 128>}, {transform_indices = @transform_3, window_bounds = array<i64: 1, 2, 128>}, {pipeline_mode = #tpu.pipeline_mode<synchronous>, transform_indices = @transform_4, window_bounds = array<i64: 128, 128>}, {pipeline_mode = #tpu.pipeline_mode<synchronous>, transform_indices = @transform_5, window_bounds = array<i64: 1, 128>}, {pipeline_mode = #tpu.pipeline_mode<synchronous>, transform_indices = @transform_6, window_bounds = array<i64: 8, 128>}]} {
    %c0_i32 = arith.constant 0 : i32
    %0 = arith.cmpi eq, %arg0, %c0_i32 : i32
    %1 = arith.extui %0 : i1 to i32
    %c0_i32_0 = arith.constant 0 : i32
    %2 = arith.cmpi ne, %1, %c0_i32_0 : i32
    scf.if %2 {
      %c0 = arith.constant 0 : index
      %c0_5 = arith.constant 0 : index
      %11 = vector.load %arg1[%c0, %c0_5] : memref<8x128xf32, #tpu.memory_space<vmem>>, vector<8x128xf32>
      %12 = arith.truncf %11 : vector<8x128xf32> to vector<8x128xbf16>
      %c0_6 = arith.constant 0 : index
      %c0_7 = arith.constant 0 : index
      %13 = vector.load %arg2[%c0_6, %c0_7] : memref<128x128xbf16, #tpu.memory_space<vmem>>, vector<128x128xbf16>
      %cst = arith.constant dense<0.000000e+00> : vector<8x128xf32>
      %14 = tpu.matmul %12, %13, %cst {dimension_numbers = #tpu.dot_dimension_numbers<[1], [0], [0], [1], [0, 0, 1, 1], [], []>} : vector<8x128xbf16>, vector<128x128xbf16>, vector<8x128xf32> -> vector<8x128xf32>
      %cst_8 = arith.constant dense<0.000000e+00> : vector<128xf32>
      %15 = vector.multi_reduction <add>, %14, %cst_8 [0] : vector<8x128xf32> to vector<128xf32>
      %16 = vector.shape_cast %15 : vector<128xf32> to vector<1x128xf32>
      %cst_9 = arith.constant 8.000000e+00 : f32
      %17 = vector.broadcast %cst_9 : f32 to vector<1x128xf32>
      %18 = arith.divf %16, %17 : vector<1x128xf32>
      %19 = arith.mulf %14, %14 : vector<8x128xf32>
      %cst_10 = arith.constant dense<0.000000e+00> : vector<128xf32>
      %20 = vector.multi_reduction <add>, %19, %cst_10 [0] : vector<8x128xf32> to vector<128xf32>
      %21 = vector.shape_cast %20 : vector<128xf32> to vector<1x128xf32>
      %cst_11 = arith.constant 8.000000e+00 : f32
      %22 = vector.broadcast %cst_11 : f32 to vector<1x128xf32>
      %23 = arith.divf %21, %22 : vector<1x128xf32>
      %24 = arith.mulf %18, %18 : vector<1x128xf32>
      %25 = arith.subf %23, %24 : vector<1x128xf32>
      %c0_12 = arith.constant 0 : index
      %c0_13 = arith.constant 0 : index
      %c0_14 = arith.constant 0 : index
      %26 = vector.load %arg4[%c0_12, %c0_13, %c0_14] : memref<1x2x128xf32, #tpu.memory_space<vmem>>, vector<1x2x128xf32>
      %27 = vector.shape_cast %26 : vector<1x2x128xf32> to vector<2x128xf32>
      %28 = vector.extract_strided_slice %27 {offsets = [0, 0], sizes = [1, 128], strides = [1, 1]} : vector<2x128xf32> to vector<1x128xf32>
      %29 = vector.extract_strided_slice %27 {offsets = [1, 0], sizes = [1, 128], strides = [1, 1]} : vector<2x128xf32> to vector<1x128xf32>
      %cst_15 = arith.constant 9.99999974E-6 : f32
      %30 = vector.broadcast %cst_15 : f32 to vector<1x128xf32>
      %31 = arith.addf %25, %30 : vector<1x128xf32>
      %32 = math.rsqrt %31 : vector<1x128xf32>
      %33 = arith.mulf %28, %32 : vector<1x128xf32>
      %34 = arith.mulf %18, %33 : vector<1x128xf32>
      %35 = arith.subf %29, %34 : vector<1x128xf32>
      %36 = vector.broadcast %33 : vector<1x128xf32> to vector<8x128xf32>
      %37 = arith.mulf %14, %36 : vector<8x128xf32>
      %38 = vector.broadcast %35 : vector<1x128xf32> to vector<8x128xf32>
      %39 = arith.addf %37, %38 : vector<8x128xf32>
      %cst_16 = arith.constant 0.000000e+00 : f32
      %40 = vector.broadcast %cst_16 : f32 to vector<8x128xf32>
      %41 = arith.maximumf %39, %40 : vector<8x128xf32>
      %c0_17 = arith.constant 0 : index
      %c0_18 = arith.constant 0 : index
      %42 = vector.load %arg8[%c0_17, %c0_18] : memref<8x128xf32, #tpu.memory_space<vmem>>, vector<8x128xf32>
      tpu.vector_store %arg8[%c0_17, %c0_18], %41 {strides = array<i32>} : memref<8x128xf32, #tpu.memory_space<vmem>>, vector<8x128xf32>,
    } else {
    }
    %c0_i32_1 = arith.constant 0 : i32
    %3 = arith.cmpi sgt, %arg0, %c0_i32_1 : i32
    %c2_i32 = arith.constant 2 : i32
    %4 = arith.cmpi slt, %arg0, %c2_i32 : i32
    %5 = arith.andi %3, %4 : i1
    %6 = arith.extui %5 : i1 to i32
    %c0_i32_2 = arith.constant 0 : i32
    %7 = arith.cmpi ne, %6, %c0_i32_2 : i32
    scf.if %7 {
      %c0 = arith.constant 0 : index
      %c0_5 = arith.constant 0 : index
      %11 = vector.load %arg8[%c0, %c0_5] : memref<8x128xf32, #tpu.memory_space<vmem>>, vector<8x128xf32>
      %12 = arith.truncf %11 : vector<8x128xf32> to vector<8x128xbf16>
      %c0_6 = arith.constant 0 : index
      %c0_7 = arith.constant 0 : index
      %c0_8 = arith.constant 0 : index
      %13 = vector.load %arg3[%c0_6, %c0_7, %c0_8] : memref<1x128x128xbf16, #tpu.memory_space<vmem>>, vector<1x128x128xbf16>
      %14 = vector.shape_cast %13 : vector<1x128x128xbf16> to vector<128x128xbf16>
      %cst = arith.constant dense<0.000000e+00> : vector<8x128xf32>
      %15 = tpu.matmul %12, %14, %cst {dimension_numbers = #tpu.dot_dimension_numbers<[1], [0], [0], [1], [0, 0, 1, 1], [], []>} : vector<8x128xbf16>, vector<128x128xbf16>, vector<8x128xf32> -> vector<8x128xf32>
      %cst_9 = arith.constant dense<0.000000e+00> : vector<128xf32>
      %16 = vector.multi_reduction <add>, %15, %cst_9 [0] : vector<8x128xf32> to vector<128xf32>
      %17 = vector.shape_cast %16 : vector<128xf32> to vector<1x128xf32>
      %cst_10 = arith.constant 8.000000e+00 : f32
      %18 = vector.broadcast %cst_10 : f32 to vector<1x128xf32>
      %19 = arith.divf %17, %18 : vector<1x128xf32>
      %20 = arith.mulf %15, %15 : vector<8x128xf32>
      %cst_11 = arith.constant dense<0.000000e+00> : vector<128xf32>
      %21 = vector.multi_reduction <add>, %20, %cst_11 [0] : vector<8x128xf32> to vector<128xf32>
      %22 = vector.shape_cast %21 : vector<128xf32> to vector<1x128xf32>
      %cst_12 = arith.constant 8.000000e+00 : f32
      %23 = vector.broadcast %cst_12 : f32 to vector<1x128xf32>
      %24 = arith.divf %22, %23 : vector<1x128xf32>
      %25 = arith.mulf %19, %19 : vector<1x128xf32>
      %26 = arith.subf %24, %25 : vector<1x128xf32>
      %c0_13 = arith.constant 0 : index
      %c0_14 = arith.constant 0 : index
      %c0_15 = arith.constant 0 : index
      %27 = vector.load %arg4[%c0_13, %c0_14, %c0_15] : memref<1x2x128xf32, #tpu.memory_space<vmem>>, vector<1x2x128xf32>
      %28 = vector.shape_cast %27 : vector<1x2x128xf32> to vector<2x128xf32>
      %29 = vector.extract_strided_slice %28 {offsets = [0, 0], sizes = [1, 128], strides = [1, 1]} : vector<2x128xf32> to vector<1x128xf32>
      %30 = vector.extract_strided_slice %28 {offsets = [1, 0], sizes = [1, 128], strides = [1, 1]} : vector<2x128xf32> to vector<1x128xf32>
      %cst_16 = arith.constant 9.99999974E-6 : f32
      %31 = vector.broadcast %cst_16 : f32 to vector<1x128xf32>
      %32 = arith.addf %26, %31 : vector<1x128xf32>
      %33 = math.rsqrt %32 : vector<1x128xf32>
      %34 = arith.mulf %29, %33 : vector<1x128xf32>
      %35 = arith.mulf %19, %34 : vector<1x128xf32>
      %36 = arith.subf %30, %35 : vector<1x128xf32>
      %37 = vector.broadcast %34 : vector<1x128xf32> to vector<8x128xf32>
      %38 = arith.mulf %15, %37 : vector<8x128xf32>
      %39 = vector.broadcast %36 : vector<1x128xf32> to vector<8x128xf32>
      %40 = arith.addf %38, %39 : vector<8x128xf32>
      %cst_17 = arith.constant 0.000000e+00 : f32
      %41 = vector.broadcast %cst_17 : f32 to vector<8x128xf32>
      %42 = arith.maximumf %40, %41 : vector<8x128xf32>
      %c0_18 = arith.constant 0 : index
      %c0_19 = arith.constant 0 : index
      %43 = vector.load %arg8[%c0_18, %c0_19] : memref<8x128xf32, #tpu.memory_space<vmem>>, vector<8x128xf32>
      tpu.vector_store %arg8[%c0_18, %c0_19], %42 {strides = array<i32>} : memref<8x128xf32, #tpu.memory_space<vmem>>, vector<8x128xf32>,
    } else {
    }
    %c2_i32_3 = arith.constant 2 : i32
    %8 = arith.cmpi eq, %arg0, %c2_i32_3 : i32
    %9 = arith.extui %8 : i1 to i32
    %c0_i32_4 = arith.constant 0 : i32
    %10 = arith.cmpi ne, %9, %c0_i32_4 : i32
    scf.if %10 {
      %c0 = arith.constant 0 : index
      %c0_5 = arith.constant 0 : index
      %11 = vector.load %arg8[%c0, %c0_5] : memref<8x128xf32, #tpu.memory_space<vmem>>, vector<8x128xf32>
      %12 = arith.truncf %11 : vector<8x128xf32> to vector<8x128xbf16>
      %c0_6 = arith.constant 0 : index
      %c0_7 = arith.constant 0 : index
      %13 = vector.load %arg5[%c0_6, %c0_7] : memref<128x128xbf16, #tpu.memory_space<vmem>>, vector<128x128xbf16>
      %cst = arith.constant dense<0.000000e+00> : vector<8x128xf32>
      %14 = tpu.matmul %12, %13, %cst {dimension_numbers = #tpu.dot_dimension_numbers<[1], [0], [0], [1], [0, 0, 1, 1], [], []>} : vector<8x128xbf16>, vector<128x128xbf16>, vector<8x128xf32> -> vector<8x128xf32>
      %c0_8 = arith.constant 0 : index
      %c0_9 = arith.constant 0 : index
      %15 = vector.load %arg6[%c0_8, %c0_9] : memref<1x128xf32, #tpu.memory_space<vmem>>, vector<1x128xf32>
      %16 = vector.broadcast %15 : vector<1x128xf32> to vector<8x128xf32>
      %17 = arith.addf %14, %16 : vector<8x128xf32>
      %c0_10 = arith.constant 0 : index
      %c0_11 = arith.constant 0 : index
      %18 = vector.load %arg7[%c0_10, %c0_11] : memref<8x128xf32, #tpu.memory_space<vmem>>, vector<8x128xf32>
      tpu.vector_store %arg7[%c0_10, %c0_11], %17 {strides = array<i32>} : memref<8x128xf32, #tpu.memory_space<vmem>>, vector<8x128xf32>,
    } else {
    }
    return
  }
  func.func @transform_0(%arg0: i32) -> (i32, i32) {
    %c0_i32 = arith.constant 0 : i32
    %c0_i32_0 = arith.constant 0 : i32
    %c0_i32_1 = arith.constant 0 : i32
    return %c0_i32, %c0_i32_0 : i32, i32
  }
  func.func @transform_1(%arg0: i32) -> (i32, i32) {
    %c0_i32 = arith.constant 0 : i32
    %c0_i32_0 = arith.constant 0 : i32
    %c0_i32_1 = arith.constant 0 : i32
    return %c0_i32, %c0_i32_0 : i32, i32
  }
  func.func @transform_2(%arg0: i32) -> (i32, i32, i32) {
    %c1_i32 = arith.constant 1 : i32
    %0 = arith.subi %arg0, %c1_i32 : i32
    %c0_i32 = arith.constant 0 : i32
    %1 = arith.maxsi %0, %c0_i32 : i32
    %c0_i32_0 = arith.constant 0 : i32
    %2 = arith.minsi %1, %c0_i32_0 : i32
    %c0_i32_1 = arith.constant 0 : i32
    %c0_i32_2 = arith.constant 0 : i32
    %c0_i32_3 = arith.constant 0 : i32
    return %2, %c0_i32_1, %c0_i32_2 : i32, i32, i32
  }
  func.func @transform_3(%arg0: i32) -> (i32, i32, i32) {
    %c1_i32 = arith.constant 1 : i32
    %0 = arith.minsi %arg0, %c1_i32 : i32
    %c0_i32 = arith.constant 0 : i32
    %c0_i32_0 = arith.constant 0 : i32
    %c0_i32_1 = arith.constant 0 : i32
    return %0, %c0_i32, %c0_i32_0 : i32, i32, i32
  }
  func.func @transform_4(%arg0: i32) -> (i32, i32) {
    %c0_i32 = arith.constant 0 : i32
    %c0_i32_0 = arith.constant 0 : i32
    %c0_i32_1 = arith.constant 0 : i32
    return %c0_i32, %c0_i32_0 : i32, i32
  }
  func.func @transform_5(%arg0: i32) -> (i32, i32) {
    %c0_i32 = arith.constant 0 : i32
    %c0_i32_0 = arith.constant 0 : i32
    %c0_i32_1 = arith.constant 0 : i32
    return %c0_i32, %c0_i32_0 : i32, i32
  }
  func.func @transform_6(%arg0: i32) -> (i32, i32) {
    %c0_i32 = arith.constant 0 : i32
    %c0_i32_0 = arith.constant 0 : i32
    %c0_i32_1 = arith.constant 0 : i32
    return %c0_i32, %c0_i32_0 : i32, i32
  }
}

</mosaic_0001>

<llo_original>
// kernel: tpu_custom_call.1
$region0: #{tpu_custom_call.1}
  #allocation0 [shape = 'u32[]', space=smem, size = 0x4, offset = 0x4, fixed_abs, tag = 'smem constant byte address 0x4 - core index']
  #allocation1 [shape = 'u32[144,128]{1,0:T(1,128)}', space=vmem, size = 0x12000, scoped, tag = 'internal scratch']
  #allocation2 [shape = 'f32[8,128]{1,0:T(8,128)}', space=vmem, size = 0x1000, scoped, tag = 'scratch operand']
  %s0 = inlined_call_operand.hbm [shape: f32[8,128], index: 0, kind: input, shape index: {}]
  %s1 = inlined_call_operand.hbm [shape: bf16[128,128], index: 1, kind: input, shape index: {}]
  %s2 = inlined_call_operand.hbm [shape: bf16[1,128,128], index: 2, kind: input, shape index: {}]
  %s3 = inlined_call_operand.vmem [shape: f32[2,2,128], index: 3, kind: input, shape index: {}]
  %s4 = inlined_call_operand.hbm [shape: bf16[128,128], index: 4, kind: input, shape index: {}]
  %s5 = inlined_call_operand.vmem [shape: f32[1,128], index: 5, kind: input, shape index: {}]
  %s6 = inlined_call_operand.hbm [shape: f32[8,128], index: 6, kind: output, shape index: {}]
  %s7 = sld [smem:[#allocation0]]
  $region85: #{tpu_custom_call.1} parent=0
    _
  %s9 = ssub.s32 1, %s7
  %s10 = scalar_select 0, %s9, %s7
  $region1: #{tpu_custom_call.1} parent=0
    #allocation3 [shape = 'u8[4096]{0}', space=vmem, size = 0x1000, scoped, tag = 'input window, operand 0, single buffered']
    #allocation4 [shape = 's32[2]{0}', space=sflag, size = 0x8, scoped, tag = 'scoped memory for tpu_custom_call.1']
    #allocation5 [shape = 's32[2]{0}', space=sflag, size = 0x8, scoped, tag = 'scoped memory for tpu_custom_call.1']
    #allocation6 [shape = 'u8[32768]{0}', space=vmem, size = 0x8000, scoped, tag = 'input window, operand 1, single buffered']
    #allocation7 [shape = 's32[1]{0}', space=sflag, size = 0x4, scoped, tag = 'scoped memory for tpu_custom_call.1']
    #allocation8 [shape = 'u8[65536]{0}', space=vmem, size = 0x10000, scoped, tag = 'input window, operand 2']
    #allocation9 [shape = 'u8[32768]{0}', space=vmem, size = 0x8000, scoped, tag = 'input window, operand 4, single buffered']
    #allocation10 [shape = 'u8[4096]{0}', space=vmem, size = 0x1000, scoped, tag = 'output window, operand 0, single buffered']
    %11 = vsyncpa [#allocation4], 0
    %12 = vsyncpa [#allocation7], 0
    %13 = vsyncpa [#allocation5], 0
    loop: start=0, step=1, limit=5
    $region2: #{tpu_custom_call.1} parent=1 // loop_pre_header
      _
    $region3: #{tpu_custom_call.1} parent=1 // loop_header
      %s15 = sphi 0, %s19
      %p16 = scmp.ge.s32.totalorder %s15, 5
      %s23 = sphi 0, %s23
      %s25 = sphi 0, %s23
      %s26 = sphi 0, %s25
      %s40 = sphi 0, %s26
      %s44 = sphi 0, %s44
      %s46 = sphi 0, %s44
      %s47 = sphi 0, %s46
      %s61 = sphi 0, %s47
      %s77 = sphi 0, %s79
      %s80 = sphi 0, %s77
      %s81 = sphi 0, %s80
      %s97 = sphi 0, %s81
      %s107 = sphi 0, %s109
      %s110 = sphi 0, %s107
      %s111 = sphi 0, %s110
      %s127 = sphi 0, %s111
      %s131 = sphi 0, %s131
      %s133 = sphi 0, %s131
      %s134 = sphi 0, %s133
      %s148 = sphi 0, %s134
      %s152 = sphi 0, %s152
      %s154 = sphi 0, %s152
      %s155 = sphi 0, %s154
      %s169 = sphi 0, %s155
      %s173 = sphi 0, %s173
      %s175 = sphi 0, %s173
      %s176 = sphi 0, %s175
      %s190 = sphi 0, %s176
    $region4: #{tpu_custom_call.1} parent=1 // loop_header_branch
      %18 = sbr.rel (%p16) target = $region8
    $region5: #{tpu_custom_call.1} parent=1 // loop_body
      %s20 = ssub.s32 %s15, 1
      %s21 = ssub.s32 %s15, 2
      %s22 = sadd.s32 %s15, 1
      %s24 = sadd.s32 %s23, 1
      %p27 = scmp.eq.s32.totalorder %s15, 2
      %p28 = scmp.ne.s32.totalorder %s23, %s25
      %p29 = scmp.eq.s32.totalorder %s15, 0
      %p30 = por %p28, %p29
      %p31 = scmp.ne.s32.totalorder %s23, %s25
      %p32 = scmp.eq.s32.totalorder %s20, 2
      %p33 = por %p31, %p32
      %p34 = scmp.ne.s32.totalorder %s25, %s26
      %p35 = scmp.eq.s32.totalorder %s20, 0
      %p36 = por %p34, %p35
      %p37 = scmp.ne.s32.totalorder %s25, %s26
      %p38 = scmp.eq.s32.totalorder %s21, 2
      %p39 = por %p37, %p38
      %p41 = scmp.ne.s32.totalorder %s26, %s40
      %p42 = scmp.eq.s32.totalorder %s21, 0
      %p43 = por %p41, %p42
      %s45 = sadd.s32 %s44, 1
      %p48 = scmp.eq.s32.totalorder %s15, 2
      %p49 = scmp.ne.s32.totalorder %s44, %s46
      %p50 = scmp.eq.s32.totalorder %s15, 0
      %p51 = por %p49, %p50
      %p52 = scmp.ne.s32.totalorder %s44, %s46
      %p53 = scmp.eq.s32.totalorder %s20, 2
      %p54 = por %p52, %p53
      %p55 = scmp.ne.s32.totalorder %s46, %s47
      %p56 = scmp.eq.s32.totalorder %s20, 0
      %p57 = por %p55, %p56
      %p58 = scmp.ne.s32.totalorder %s46, %s47
      %p59 = scmp.eq.s32.totalorder %s21, 2
      %p60 = por %p58, %p59
      %p62 = scmp.ne.s32.totalorder %s47, %s61
      %p63 = scmp.eq.s32.totalorder %s21, 0
      %p64 = por %p62, %p63
      %s65 = ssub.s32 %s15, 1
      %p66 = scmp.gt.s32.totalorder %s65, 0
      %s67 = scalar_select %p66, %s65, 0
      %p68 = scmp.lt.s32.totalorder %s67, 0
      %s69 = scalar_select %p68, %s67, 0
      %s70 = ssub.s32 %s22, 1
      %p71 = scmp.gt.s32.totalorder %s70, 0
      %s72 = scalar_select %p71, %s70, 0
      %p73 = scmp.lt.s32.totalorder %s72, 0
      %s74 = scalar_select %p73, %s72, 0
      %s75 = ssub.s32 %s69, %s74
      %p76 = scmp.eq.s32.totalorder %s75, 0
      %s78 = sadd.s32 %s77, 1
      %s79 = scalar_select %p76, %s77, %s78
      %p82 = pneg %p76
      %p83 = scmp.eq.s32.totalorder %s15, 2
      %p84 = por %p82, %p83
      %p85 = scmp.ne.s32.totalorder %s77, %s80
      %p86 = scmp.eq.s32.totalorder %s15, 0
      %p87 = por %p85, %p86
      %p88 = scmp.ne.s32.totalorder %s77, %s80
      %p89 = scmp.eq.s32.totalorder %s20, 2
      %p90 = por %p88, %p89
      %p91 = scmp.ne.s32.totalorder %s80, %s81
      %p92 = scmp.eq.s32.totalorder %s20, 0
      %p93 = por %p91, %p92
      %p94 = scmp.ne.s32.totalorder %s80, %s81
      %p95 = scmp.eq.s32.totalorder %s21, 2
      %p96 = por %p94, %p95
      %p98 = scmp.ne.s32.totalorder %s81, %s97
      %p99 = scmp.eq.s32.totalorder %s21, 0
      %p100 = por %p98, %p99
      %p101 = scmp.lt.s32.totalorder %s15, 1
      %s102 = scalar_select %p101, %s15, 1
      %p103 = scmp.lt.s32.totalorder %s22, 1
      %s104 = scalar_select %p103, %s22, 1
      %s105 = ssub.s32 %s102, %s104
      %p106 = scmp.eq.s32.totalorder %s105, 0
      %s108 = sadd.s32 %s107, 1
      %s109 = scalar_select %p106, %s107, %s108
      %p112 = pneg %p106
      %p113 = scmp.eq.s32.totalorder %s15, 2
      %p114 = por %p112, %p113
      %p115 = scmp.ne.s32.totalorder %s107, %s110
      %p116 = scmp.eq.s32.totalorder %s15, 0
      %p117 = por %p115, %p116
      %p118 = scmp.ne.s32.totalorder %s107, %s110
      %p119 = scmp.eq.s32.totalorder %s20, 2
      %p120 = por %p118, %p119
      %p121 = scmp.ne.s32.totalorder %s110, %s111
      %p122 = scmp.eq.s32.totalorder %s20, 0
      %p123 = por %p121, %p122
      %p124 = scmp.ne.s32.totalorder %s110, %s111
      %p125 = scmp.eq.s32.totalorder %s21, 2
      %p126 = por %p124, %p125
      %p128 = scmp.ne.s32.totalorder %s111, %s127
      %p129 = scmp.eq.s32.totalorder %s21, 0
      %p130 = por %p128, %p129
      %s132 = sadd.s32 %s131, 1
      %p135 = scmp.eq.s32.totalorder %s15, 2
      %p136 = scmp.ne.s32.totalorder %s131, %s133
      %p137 = scmp.eq.s32.totalorder %s15, 0
      %p138 = por %p136, %p137
      %p139 = scmp.ne.s32.totalorder %s131, %s133
      %p140 = scmp.eq.s32.totalorder %s20, 2
      %p141 = por %p139, %p140
      %p142 = scmp.ne.s32.totalorder %s133, %s134
      %p143 = scmp.eq.s32.totalorder %s20, 0
      %p144 = por %p142, %p143
      %p145 = scmp.ne.s32.totalorder %s133, %s134
      %p146 = scmp.eq.s32.totalorder %s21, 2
      %p147 = por %p145, %p146
      %p149 = scmp.ne.s32.totalorder %s134, %s148
      %p150 = scmp.eq.s32.totalorder %s21, 0
      %p151 = por %p149, %p150
      %s153 = sadd.s32 %s152, 1
      %p156 = scmp.eq.s32.totalorder %s15, 2
      %p157 = scmp.ne.s32.totalorder %s152, %s154
      %p158 = scmp.eq.s32.totalorder %s15, 0
      %p159 = por %p157, %p158
      %p160 = scmp.ne.s32.totalorder %s152, %s154
      %p161 = scmp.eq.s32.totalorder %s20, 2
      %p162 = por %p160, %p161
      %p163 = scmp.ne.s32.totalorder %s154, %s155
      %p164 = scmp.eq.s32.totalorder %s20, 0
      %p165 = por %p163, %p164
      %p166 = scmp.ne.s32.totalorder %s154, %s155
      %p167 = scmp.eq.s32.totalorder %s21, 2
      %p168 = por %p166, %p167
      %p170 = scmp.ne.s32.totalorder %s155, %s169
      %p171 = scmp.eq.s32.totalorder %s21, 0
      %p172 = por %p170, %p171
      %s174 = sadd.s32 %s173, 1
      %p177 = scmp.eq.s32.totalorder %s15, 2
      %p178 = scmp.ne.s32.totalorder %s173, %s175
      %p179 = scmp.eq.s32.totalorder %s15, 0
      %p180 = por %p178, %p179
      %p181 = scmp.ne.s32.totalorder %s173, %s175
      %p182 = scmp.eq.s32.totalorder %s20, 2
      %p183 = por %p181, %p182
      %p184 = scmp.ne.s32.totalorder %s175, %s176
      %p185 = scmp.eq.s32.totalorder %s20, 0
      %p186 = por %p184, %p185
      %p187 = scmp.ne.s32.totalorder %s175, %s176
      %p188 = scmp.eq.s32.totalorder %s21, 2
      %p189 = por %p187, %p188
      %p191 = scmp.ne.s32.totalorder %s176, %s190
      %p192 = scmp.eq.s32.totalorder %s21, 0
      %p193 = por %p191, %p192
      %p194 = scmp.le.s32.totalorder 1, %s15
      %p195 = scmp.lt.s32.totalorder %s15, 4
      %p196 = pnand %p194, %p195
      %p197 = pneg %p196
      // Predicated region
      $region9: #{tpu_custom_call.1} parent=5 // pred_check
        _
      $region10: #{tpu_custom_call.1} parent=5 // pred_check_branch
        %199 = sbr.rel (%p196) target = $region12
      $region11: #{tpu_custom_call.1} parent=5 // pred_region
        %s200 = ssub.s32 %s15, 1
        // Predicated region
        $region13: #{tpu_custom_call.1} parent=11 // pred_check
          %p201 = pneg %p36
        $region14: #{tpu_custom_call.1} parent=11 // pred_check_branch
          %203 = sbr.rel (%p201) target = $region16
        $region15: #{tpu_custom_call.1} parent=11 // pred_region
          %s205 = ssub.s32 128, 128
          %206 = vsyncadd [#allocation4], %s205
          %s208 = sshll.u32 [#allocation3], 4
          %s209 = int_to_ptr.vmem [resolvable:$true] %s208
          %211 = dma.hbm_to_vmem [thread:$0]  %s0, 128, %s209, [#allocation4]
        $region16: #{tpu_custom_call.1} parent=11 // pred_fallthru
          _
        // Predicated region
        $region17: #{tpu_custom_call.1} parent=11 // pred_check
          %p212 = pneg %p57
        $region18: #{tpu_custom_call.1} parent=11 // pred_check_branch
          %214 = sbr.rel (%p212) target = $region20
        $region19: #{tpu_custom_call.1} parent=11 // pred_region
          %s216 = ssub.s32 1024, 1024
          %217 = vsyncadd [#allocation7], %s216
          %s218 = sshll.u32 [#allocation6], 4
          %s219 = int_to_ptr.vmem [resolvable:$true] %s218
          %224 = dma.hbm_to_vmem [thread:$0]  %s1, 1024, %s219, [#allocation7], 64, 64, 4
        $region20: #{tpu_custom_call.1} parent=11 // pred_fallthru
          _
        // Predicated region
        $region21: #{tpu_custom_call.1} parent=11 // pred_check
          %p225 = pneg %p144
        $region22: #{tpu_custom_call.1} parent=11 // pred_check_branch
          %227 = sbr.rel (%p225) target = $region24
        $region23: #{tpu_custom_call.1} parent=11 // pred_region
          %s229 = ssub.s32 1024, 1024
          %230 = vsyncadd [#allocation7], %s229
          %s231 = sshll.u32 [#allocation9], 4
          %s232 = int_to_ptr.vmem [resolvable:$true] %s231
          %237 = dma.hbm_to_vmem [thread:$0]  %s4, 1024, %s232, [#allocation7], 64, 64, 4
        $region24: #{tpu_custom_call.1} parent=11 // pred_fallthru
          _
        // Predicated region
        $region25: #{tpu_custom_call.1} parent=11 // pred_check
          %p238 = pneg %p165
        $region26: #{tpu_custom_call.1} parent=11 // pred_check_branch
          %240 = sbr.rel (%p238) target = $region28
        $region27: #{tpu_custom_call.1} parent=11 // pred_region
          _
        $region28: #{tpu_custom_call.1} parent=11 // pred_fallthru
          _
      $region12: #{tpu_custom_call.1} parent=5 // pred_fallthru
        _
      %p241 = scmp.lt.s32.totalorder %s15, 3
      // Predicated region
      $region29: #{tpu_custom_call.1} parent=5 // pred_check
        %p242 = pneg %p241
      $region30: #{tpu_custom_call.1} parent=5 // pred_check_branch
        %244 = sbr.rel (%p242) target = $region32
      $region31: #{tpu_custom_call.1} parent=5 // pred_region
        // Predicated region
        $region33: #{tpu_custom_call.1} parent=31 // pred_check
          %p245 = pneg %p87
        $region34: #{tpu_custom_call.1} parent=31 // pred_check_branch
          %247 = sbr.rel (%p245) target = $region36
        $region35: #{tpu_custom_call.1} parent=31 // pred_region
          %s248 = sand.u32 %s15, 1
          %s249 = scalar_lea.sflag [#allocation4], %s248
          %s250 = sand.u32 %s77, 1
          %s251 = smul.addr %s250, 64
          %s252 = scalar_lea.vmem [#allocation8], %s251
          %s253 = ssub.s32 %s15, 1
          %p254 = scmp.gt.s32.totalorder %s253, 0
          %s255 = scalar_select %p254, %s253, 0
          %p256 = scmp.lt.s32.totalorder %s255, 0
          %s257 = scalar_select %p256, %s255, 0
          %s259 = ssub.s32 1024, 1024
          %260 = vsyncadd %s249, %s259
          %s261 = smul.addr %s257, 16
          %s262 = smul.addr %s261, 64
          %s263 = scalar_lea.hbm %s2, %s262
          %s264 = sshll.u32 %s252, 4
          %s265 = int_to_ptr.vmem [resolvable:$true] %s264
          %270 = dma.hbm_to_vmem [thread:$0]  %s263, 1024, %s265, %s249, 64, 64, 4
        $region36: #{tpu_custom_call.1} parent=31 // pred_fallthru
          _
        // Predicated region
        $region37: #{tpu_custom_call.1} parent=31 // pred_check
          %p271 = pneg %p117
        $region38: #{tpu_custom_call.1} parent=31 // pred_check_branch
          %273 = sbr.rel (%p271) target = $region40
        $region39: #{tpu_custom_call.1} parent=31 // pred_region
          %p274 = scmp.lt.s32.totalorder %s15, 1
          %s275 = scalar_select %p274, %s15, 1
          %p276 = scmp.lt.s32.totalorder %s275, 1
          %s277 = scalar_select %p276, %s275, 1
          %s278 = smul.addr %s277, 2
          %s279 = scalar_lea.vmem %s3, %s278
          %p280 = scmp.lt.s32.totalorder %s15, 1
          %s281 = scalar_select %p280, %s15, 1
        $region40: #{tpu_custom_call.1} parent=31 // pred_fallthru
          _
      $region32: #{tpu_custom_call.1} parent=5 // pred_fallthru
        _
      %p282 = scmp.le.s32.totalorder 1, %s15
      %p283 = scmp.lt.s32.totalorder %s15, 4
      %p284 = pnand %p282, %p283
      %p285 = pneg %p284
      // Predicated region
      $region41: #{tpu_custom_call.1} parent=5 // pred_check
        _
      $region42: #{tpu_custom_call.1} parent=5 // pred_check_branch
        %287 = sbr.rel (%p284) target = $region44
      $region43: #{tpu_custom_call.1} parent=5 // pred_region
        %s288 = ssub.s32 %s15, 1
        // Predicated region
        $region45: #{tpu_custom_call.1} parent=43 // pred_check
          %p289 = pneg %p36
        $region46: #{tpu_custom_call.1} parent=43 // pred_check_branch
          %291 = sbr.rel (%p289) target = $region48
        $region47: #{tpu_custom_call.1} parent=43 // pred_region
          %292 = dma.done [#allocation4], 128
        $region48: #{tpu_custom_call.1} parent=43 // pred_fallthru
          _
        // Predicated region
        $region49: #{tpu_custom_call.1} parent=43 // pred_check
          %p293 = pneg %p57
        $region50: #{tpu_custom_call.1} parent=43 // pred_check_branch
          %295 = sbr.rel (%p293) target = $region52
        $region51: #{tpu_custom_call.1} parent=43 // pred_region
          %296 = dma.done [#allocation7], 1024
        $region52: #{tpu_custom_call.1} parent=43 // pred_fallthru
          _
        %s297 = sand.u32 %s20, 1
        %s298 = scalar_lea.sflag [#allocation4], %s297
        %s299 = sand.u32 %s80, 1
        %s300 = smul.addr %s299, 64
        %s301 = scalar_lea.vmem [#allocation8], %s300
        // Predicated region
        $region53: #{tpu_custom_call.1} parent=43 // pred_check
          %p302 = pneg %p93
        $region54: #{tpu_custom_call.1} parent=43 // pred_check_branch
          %304 = sbr.rel (%p302) target = $region56
        $region55: #{tpu_custom_call.1} parent=43 // pred_region
          %305 = dma.done %s298, 1024
        $region56: #{tpu_custom_call.1} parent=43 // pred_fallthru
          _
        // Predicated region
        $region57: #{tpu_custom_call.1} parent=43 // pred_check
          %p306 = pneg %p144
        $region58: #{tpu_custom_call.1} parent=43 // pred_check_branch
          %308 = sbr.rel (%p306) target = $region60
        $region59: #{tpu_custom_call.1} parent=43 // pred_region
          %309 = dma.done [#allocation7], 1024
        $region60: #{tpu_custom_call.1} parent=43 // pred_fallthru
          _
        %p310 = pneg %p36
        %p311 = pneg %p33
        %p312 = pneg %p57
        %p313 = pneg %p54
        %s314 = sand.u32 %s20, 1
        %s315 = scalar_lea.sflag [#allocation4], %s314
        %s316 = sand.u32 %s80, 1
        %s317 = smul.addr %s316, 64
        %s318 = scalar_lea.vmem [#allocation8], %s317
        %p319 = pneg %p93
        %p320 = pneg %p90
        %p321 = scmp.lt.s32.totalorder %s20, 1
        %s322 = scalar_select %p321, %s20, 1
        %p323 = scmp.lt.s32.totalorder %s322, 1
        %s324 = scalar_select %p323, %s322, 1
        %s325 = smul.addr %s324, 2
        %s326 = scalar_lea.vmem %s3, %s325
        %p327 = pneg %p123
        %p328 = pneg %p120
        %p329 = pneg %p144
        %p330 = pneg %p141
        %p331 = pneg %p165
        %p332 = pneg %p162
        %p333 = pneg %p186
        %p334 = pneg %p183
        %s335 = ssub.s32 %s20, 1
        %p336 = scmp.gt.s32.totalorder %s335, 0
        %s337 = scalar_select %p336, %s335, 0
        %p338 = scmp.lt.s32.totalorder %s337, 0
        %s339 = scalar_select %p338, %s337, 0
        %p340 = scmp.lt.s32.totalorder %s20, 1
        %s341 = scalar_select %p340, %s20, 1
        %p342 = scmp.lt.s32.totalorder %s341, 1
        %s343 = scalar_select %p342, %s341, 1
        %s344 = smul.addr %s343, 2
        %s345 = scalar_lea.vmem %s3, %s344
        %p346 = scmp.lt.s32.totalorder %s20, 1
        %s347 = scalar_select %p346, %s20, 1
        %p349 = scmp.eq.s32.totalorder %s20, 0
        // Predicated region
        $region61: #{tpu_custom_call.1} parent=43 // pred_check
          %p350 = pneg %p349
        $region62: #{tpu_custom_call.1} parent=43 // pred_check_branch
          %352 = sbr.rel (%p350) target = $region64
        $region63: #{tpu_custom_call.1} parent=43 // pred_region
          %v353 = vld [vmem:[#allocation3] sm:$0xff]
          %v354 = vpack.c.bf16 %v353, %v353
          %v355 = vld [vmem:[#allocation6] sm:$0xf]
          %v356 = vld [vmem:[#allocation6 + $0x4] sm:$0xf]
          %v357 = vld [vmem:[#allocation6 + $0x8] sm:$0xf]
          %v358 = vld [vmem:[#allocation6 + $0xc] sm:$0xf]
          %v359 = vld [vmem:[#allocation6 + $0x10] sm:$0xf]
          %v360 = vld [vmem:[#allocation6 + $0x14] sm:$0xf]
          %v361 = vld [vmem:[#allocation6 + $0x18] sm:$0xf]
          %v362 = vld [vmem:[#allocation6 + $0x1c] sm:$0xf]
          %v363 = vld [vmem:[#allocation6 + $0x20] sm:$0xf]
          %v364 = vld [vmem:[#allocation6 + $0x24] sm:$0xf]
          %v365 = vld [vmem:[#allocation6 + $0x28] sm:$0xf]
          %v366 = vld [vmem:[#allocation6 + $0x2c] sm:$0xf]
          %v367 = vld [vmem:[#allocation6 + $0x30] sm:$0xf]
          %v368 = vld [vmem:[#allocation6 + $0x34] sm:$0xf]
          %v369 = vld [vmem:[#allocation6 + $0x38] sm:$0xf]
          %v370 = vld [vmem:[#allocation6 + $0x3c] sm:$0xf]
          %v387 = vunpack.c.l.b16 %v355
          %v388 = vunpack.c.l.b16 %v356
          %v389 = vunpack.c.l.b16 %v357
          %v390 = vunpack.c.l.b16 %v358
          %v391 = vunpack.c.l.b16 %v359
          %v392 = vunpack.c.l.b16 %v360
          %v393 = vunpack.c.l.b16 %v361
          %v394 = vunpack.c.l.b16 %v362
          %v395 = vunpack.c.l.b16 %v363
          %v396 = vunpack.c.l.b16 %v364
          %v397 = vunpack.c.l.b16 %v365
          %v398 = vunpack.c.l.b16 %v366
          %v399 = vunpack.c.l.b16 %v367
          %v400 = vunpack.c.l.b16 %v368
          %v401 = vunpack.c.l.b16 %v369
          %v402 = vunpack.c.l.b16 %v370
          %v403 = vpack.c.b16 %v388, %v387
          %v404 = vpack.c.b16 %v390, %v389
          %v405 = vpack.c.b16 %v392, %v391
          %v406 = vpack.c.b16 %v394, %v393
          %v407 = vpack.c.b16 %v396, %v395
          %v408 = vpack.c.b16 %v398, %v397
          %v409 = vpack.c.b16 %v400, %v399
          %v410 = vpack.c.b16 %v402, %v401
          %419 = vmatprep.subr.bf16.mxu0 0
          %420 = vmatpush1.bf16.msra.mxu0 %v403
          %421 = vmatprep.subr.bf16.mxu0 0
          %422 = vmatpush1.bf16.msra.mxu0 %v404
          %423 = vmatprep.subr.bf16.mxu0 0
          %424 = vmatpush1.bf16.msra.mxu0 %v405
          %425 = vmatprep.subr.bf16.mxu0 0
          %426 = vmatpush1.bf16.msra.mxu0 %v406
          %427 = vmatprep.subr.bf16.mxu0 0
          %428 = vmatpush1.bf16.msra.mxu0 %v407
          %429 = vmatprep.subr.bf16.mxu0 0
          %430 = vmatpush1.bf16.msra.mxu0 %v408
          %431 = vmatprep.subr.bf16.mxu0 0
          %432 = vmatpush1.bf16.msra.mxu0 %v409
          %433 = vmatprep.subr.bf16.mxu0 0
          %434 = vmatpush1.bf16.msra.mxu0 %v410
          %435 = vmatprep.subr.bf16.mxu0 0
          %436 = vmatpush1.bf16.msra.mxu0 0
          %437 = vmatprep.subr.bf16.mxu0 0
          %438 = vmatpush1.bf16.msra.mxu0 0
          %439 = vmatprep.subr.bf16.mxu0 0
          %440 = vmatpush1.bf16.msra.mxu0 0
          %441 = vmatprep.subr.bf16.mxu0 0
          %442 = vmatpush1.bf16.msra.mxu0 0
          %443 = vmatprep.subr.bf16.mxu0 0
          %444 = vmatpush1.bf16.msra.mxu0 0
          %445 = vmatprep.subr.bf16.mxu0 0
          %446 = vmatpush1.bf16.msra.mxu0 0
          %447 = vmatprep.subr.bf16.mxu0 0
          %448 = vmatpush1.bf16.msra.mxu0 0
          %449 = vmatprep.subr.bf16.mxu0 0
          %450 = vmatpush1.bf16.msra.mxu0 0
          %451 = vmatprep.mubr.bf16.mxu0 0
          %452 = vmatmul.mubr.bf16.gmra.mrb[0].mxu0 %v354
          %v453 = vpop.f32.mrb[0].mxu0
          %v454 = vadd.f32 0.0, %v453
          %v455 = vpop.f32.mrb[0].mxu0
          %v456 = vpop.f32.mrb[0].mxu0
          %v457 = vpop.f32.mrb[0].mxu0
          %458 = vdwg.mxu0
          %v459 = vrot.slane %v454, 4
          %v460 = vadd.f32 %v454, %v459
          %v461 = vrot.slane %v460, 2
          %v462 = vadd.f32 %v460, %v461
          %v463 = vrot.slane %v462, 1
          %v464 = vadd.f32 %v462, %v463
          %v465 = vrcp.pop 8.0
          %v466 = vmul.f32 %v464, %v465
          %v467 = vmul.f32 %v454, %v454
          %v468 = vrot.slane %v467, 4
          %v469 = vadd.f32 %v467, %v468
          %v470 = vrot.slane %v469, 2
          %v471 = vadd.f32 %v469, %v470
          %v472 = vrot.slane %v471, 1
          %v473 = vadd.f32 %v471, %v472
          %v474 = vmul.f32 %v473, %v465
          %v475 = vmul.f32 %v466, %v466
          %v476 = vsub.f32 %v474, %v475
          %v477 = vld [vmem:[%s345] sm:$0x3]
          %v478 = vadd.f32 %v476, 1e-05
          %v479 = vrsqrt.pop %v478
          %v480 = vmul.f32 %v477, %v479
          %v481 = vmul.f32 %v466, %v480
          %v483 = vrot.slane %v481, 7
          %v485 = vsub.f32 %v477, %v483
          %v486 = vlaneseq
          %v487 = vshrl.u32 %v486, 7
          %v488 = vsub.s32 0, %v487
          %v489 = vrot.slane %v480, %v488
          %v490 = vmul.f32 %v454, %v489
          %v491 = vlaneseq
          %v492 = vshrl.u32 %v491, 7
          %v493 = vsub.s32 1, %v492
          %v494 = vrot.slane %v485, %v493
          %v495 = vadd.f32 %v490, %v494
          %v496 = vmax.f32 %v495, 0.0
          %497 = vst [vmem:[#allocation2] sm:$0xff] %v496
        $region64: #{tpu_custom_call.1} parent=43 // pred_fallthru
          _
        %p498 = scmp.gt.s32.totalorder %s20, 0
        %p499 = scmp.lt.s32.totalorder %s20, 2
        %p500 = pnand %p498, %p499
        %p501 = pneg %p500
        // Predicated region
        $region65: #{tpu_custom_call.1} parent=43 // pred_check
          _
        $region66: #{tpu_custom_call.1} parent=43 // pred_check_branch
          %503 = sbr.rel (%p500) target = $region68
        $region67: #{tpu_custom_call.1} parent=43 // pred_region
          %v504 = vld [vmem:[#allocation2] sm:$0xff]
          %v505 = vpack.c.bf16 %v504, %v504
          %v506 = vld [vmem:[%s301] sm:$0xf]
          %v507 = vld [vmem:[%s301 + $0x4] sm:$0xf]
          %v508 = vld [vmem:[%s301 + $0x8] sm:$0xf]
          %v509 = vld [vmem:[%s301 + $0xc] sm:$0xf]
          %v510 = vld [vmem:[%s301 + $0x10] sm:$0xf]
          %v511 = vld [vmem:[%s301 + $0x14] sm:$0xf]
          %v512 = vld [vmem:[%s301 + $0x18] sm:$0xf]
          %v513 = vld [vmem:[%s301 + $0x1c] sm:$0xf]
          %v514 = vld [vmem:[%s301 + $0x20] sm:$0xf]
          %v515 = vld [vmem:[%s301 + $0x24] sm:$0xf]
          %v516 = vld [vmem:[%s301 + $0x28] sm:$0xf]
          %v517 = vld [vmem:[%s301 + $0x2c] sm:$0xf]
          %v518 = vld [vmem:[%s301 + $0x30] sm:$0xf]
          %v519 = vld [vmem:[%s301 + $0x34] sm:$0xf]
          %v520 = vld [vmem:[%s301 + $0x38] sm:$0xf]
          %v521 = vld [vmem:[%s301 + $0x3c] sm:$0xf]
          %v538 = vunpack.c.l.b16 %v506
          %v539 = vunpack.c.l.b16 %v507
          %v540 = vunpack.c.l.b16 %v508
          %v541 = vunpack.c.l.b16 %v509
          %v542 = vunpack.c.l.b16 %v510
          %v543 = vunpack.c.l.b16 %v511
          %v544 = vunpack.c.l.b16 %v512
          %v545 = vunpack.c.l.b16 %v513
          %v546 = vunpack.c.l.b16 %v514
          %v547 = vunpack.c.l.b16 %v515
          %v548 = vunpack.c.l.b16 %v516
          %v549 = vunpack.c.l.b16 %v517
          %v550 = vunpack.c.l.b16 %v518
          %v551 = vunpack.c.l.b16 %v519
          %v552 = vunpack.c.l.b16 %v520
          %v553 = vunpack.c.l.b16 %v521
          %v554 = vpack.c.b16 %v539, %v538
          %v555 = vpack.c.b16 %v541, %v540
          %v556 = vpack.c.b16 %v543, %v542
          %v557 = vpack.c.b16 %v545, %v544
          %v558 = vpack.c.b16 %v547, %v546
          %v559 = vpack.c.b16 %v549, %v548
          %v560 = vpack.c.b16 %v551, %v550
          %v561 = vpack.c.b16 %v553, %v552
          %570 = vmatprep.subr.bf16.mxu0 0
          %571 = vmatpush1.bf16.msra.mxu0 %v554
          %572 = vmatprep.subr.bf16.mxu0 0
          %573 = vmatpush1.bf16.msra.mxu0 %v555
          %574 = vmatprep.subr.bf16.mxu0 0
          %575 = vmatpush1.bf16.msra.mxu0 %v556
          %576 = vmatprep.subr.bf16.mxu0 0
          %577 = vmatpush1.bf16.msra.mxu0 %v557
          %578 = vmatprep.subr.bf16.mxu0 0
          %579 = vmatpush1.bf16.msra.mxu0 %v558
          %580 = vmatprep.subr.bf16.mxu0 0
          %581 = vmatpush1.bf16.msra.mxu0 %v559
          %582 = vmatprep.subr.bf16.mxu0 0
          %583 = vmatpush1.bf16.msra.mxu0 %v560
          %584 = vmatprep.subr.bf16.mxu0 0
          %585 = vmatpush1.bf16.msra.mxu0 %v561
          %586 = vmatprep.subr.bf16.mxu0 0
          %587 = vmatpush1.bf16.msra.mxu0 0
          %588 = vmatprep.subr.bf16.mxu0 0
          %589 = vmatpush1.bf16.msra.mxu0 0
          %590 = vmatprep.subr.bf16.mxu0 0
          %591 = vmatpush1.bf16.msra.mxu0 0
          %592 = vmatprep.subr.bf16.mxu0 0
          %593 = vmatpush1.bf16.msra.mxu0 0
          %594 = vmatprep.subr.bf16.mxu0 0
          %595 = vmatpush1.bf16.msra.mxu0 0
          %596 = vmatprep.subr.bf16.mxu0 0
          %597 = vmatpush1.bf16.msra.mxu0 0
          %598 = vmatprep.subr.bf16.mxu0 0
          %599 = vmatpush1.bf16.msra.mxu0 0
          %600 = vmatprep.subr.bf16.mxu0 0
          %601 = vmatpush1.bf16.msra.mxu0 0
          %602 = vmatprep.mubr.bf16.mxu0 0
          %603 = vmatmul.mubr.bf16.gmra.mrb[0].mxu0 %v505
          %v604 = vpop.f32.mrb[0].mxu0
          %v605 = vadd.f32 0.0, %v604
          %v606 = vpop.f32.mrb[0].mxu0
          %v607 = vpop.f32.mrb[0].mxu0
          %v608 = vpop.f32.mrb[0].mxu0
          %609 = vdwg.mxu0
          %v610 = vrot.slane %v605, 4
          %v611 = vadd.f32 %v605, %v610
          %v612 = vrot.slane %v611, 2
          %v613 = vadd.f32 %v611, %v612
          %v614 = vrot.slane %v613, 1
          %v615 = vadd.f32 %v613, %v614
          %v616 = vrcp.pop 8.0
          %v617 = vmul.f32 %v615, %v616
          %v618 = vmul.f32 %v605, %v605
          %v619 = vrot.slane %v618, 4
          %v620 = vadd.f32 %v618, %v619
          %v621 = vrot.slane %v620, 2
          %v622 = vadd.f32 %v620, %v621
          %v623 = vrot.slane %v622, 1
          %v624 = vadd.f32 %v622, %v623
          %v625 = vmul.f32 %v624, %v616
          %v626 = vmul.f32 %v617, %v617
          %v627 = vsub.f32 %v625, %v626
          %v628 = vld [vmem:[%s345] sm:$0x3]
          %v629 = vadd.f32 %v627, 1e-05
          %v630 = vrsqrt.pop %v629
          %v631 = vmul.f32 %v628, %v630
          %v632 = vmul.f32 %v617, %v631
          %v634 = vrot.slane %v632, 7
          %v636 = vsub.f32 %v628, %v634
          %v637 = vlaneseq
          %v638 = vshrl.u32 %v637, 7
          %v639 = vsub.s32 0, %v638
          %v640 = vrot.slane %v631, %v639
          %v641 = vmul.f32 %v605, %v640
          %v642 = vlaneseq
          %v643 = vshrl.u32 %v642, 7
          %v644 = vsub.s32 1, %v643
          %v645 = vrot.slane %v636, %v644
          %v646 = vadd.f32 %v641, %v645
          %v647 = vmax.f32 %v646, 0.0
          %648 = vst [vmem:[#allocation2] sm:$0xff] %v647
        $region68: #{tpu_custom_call.1} parent=43 // pred_fallthru
          _
        %p649 = scmp.eq.s32.totalorder %s20, 2
        // Predicated region
        $region69: #{tpu_custom_call.1} parent=43 // pred_check
          %p650 = pneg %p649
        $region70: #{tpu_custom_call.1} parent=43 // pred_check_branch
          %652 = sbr.rel (%p650) target = $region72
        $region71: #{tpu_custom_call.1} parent=43 // pred_region
          %v653 = vld [vmem:[#allocation2] sm:$0xff]
          %v654 = vpack.c.bf16 %v653, %v653
          %v655 = vld [vmem:[#allocation9] sm:$0xf]
          %v656 = vld [vmem:[#allocation9 + $0x4] sm:$0xf]
          %v657 = vld [vmem:[#allocation9 + $0x8] sm:$0xf]
          %v658 = vld [vmem:[#allocation9 + $0xc] sm:$0xf]
          %v659 = vld [vmem:[#allocation9 + $0x10] sm:$0xf]
          %v660 = vld [vmem:[#allocation9 + $0x14] sm:$0xf]
          %v661 = vld [vmem:[#allocation9 + $0x18] sm:$0xf]
          %v662 = vld [vmem:[#allocation9 + $0x1c] sm:$0xf]
          %v663 = vld [vmem:[#allocation9 + $0x20] sm:$0xf]
          %v664 = vld [vmem:[#allocation9 + $0x24] sm:$0xf]
          %v665 = vld [vmem:[#allocation9 + $0x28] sm:$0xf]
          %v666 = vld [vmem:[#allocation9 + $0x2c] sm:$0xf]
          %v667 = vld [vmem:[#allocation9 + $0x30] sm:$0xf]
          %v668 = vld [vmem:[#allocation9 + $0x34] sm:$0xf]
          %v669 = vld [vmem:[#allocation9 + $0x38] sm:$0xf]
          %v670 = vld [vmem:[#allocation9 + $0x3c] sm:$0xf]
          %v671 = vld [vmem:[%s5] sm:$0x1]
          %v673 = vlaneseq
          %v674 = vshrl.u32 %v673, 7
          %v675 = vsub.s32 0, %v674
          %v676 = vrot.slane %v671, %v675
          %v694 = vunpack.c.l.b16 %v655
          %v695 = vunpack.c.l.b16 %v656
          %v696 = vunpack.c.l.b16 %v657
          %v697 = vunpack.c.l.b16 %v658
          %v698 = vunpack.c.l.b16 %v659
          %v699 = vunpack.c.l.b16 %v660
          %v700 = vunpack.c.l.b16 %v661
          %v701 = vunpack.c.l.b16 %v662
          %v702 = vunpack.c.l.b16 %v663
          %v703 = vunpack.c.l.b16 %v664
          %v704 = vunpack.c.l.b16 %v665
          %v705 = vunpack.c.l.b16 %v666
          %v706 = vunpack.c.l.b16 %v667
          %v707 = vunpack.c.l.b16 %v668
          %v708 = vunpack.c.l.b16 %v669
          %v709 = vunpack.c.l.b16 %v670
          %v710 = vpack.c.b16 %v695, %v694
          %v711 = vpack.c.b16 %v697, %v696
          %v712 = vpack.c.b16 %v699, %v698
          %v713 = vpack.c.b16 %v701, %v700
          %v714 = vpack.c.b16 %v703, %v702
          %v715 = vpack.c.b16 %v705, %v704
          %v716 = vpack.c.b16 %v707, %v706
          %v717 = vpack.c.b16 %v709, %v708
          %726 = vmatprep.subr.bf16.mxu0 0
          %727 = vmatpush1.bf16.msra.mxu0 %v710
          %728 = vmatprep.subr.bf16.mxu0 0
          %729 = vmatpush1.bf16.msra.mxu0 %v711
          %730 = vmatprep.subr.bf16.mxu0 0
          %731 = vmatpush1.bf16.msra.mxu0 %v712
          %732 = vmatprep.subr.bf16.mxu0 0
          %733 = vmatpush1.bf16.msra.mxu0 %v713
          %734 = vmatprep.subr.bf16.mxu0 0
          %735 = vmatpush1.bf16.msra.mxu0 %v714
          %736 = vmatprep.subr.bf16.mxu0 0
          %737 = vmatpush1.bf16.msra.mxu0 %v715
          %738 = vmatprep.subr.bf16.mxu0 0
          %739 = vmatpush1.bf16.msra.mxu0 %v716
          %740 = vmatprep.subr.bf16.mxu0 0
          %741 = vmatpush1.bf16.msra.mxu0 %v717
          %742 = vmatprep.subr.bf16.mxu0 0
          %743 = vmatpush1.bf16.msra.mxu0 0
          %744 = vmatprep.subr.bf16.mxu0 0
          %745 = vmatpush1.bf16.msra.mxu0 0
          %746 = vmatprep.subr.bf16.mxu0 0
          %747 = vmatpush1.bf16.msra.mxu0 0
          %748 = vmatprep.subr.bf16.mxu0 0
          %749 = vmatpush1.bf16.msra.mxu0 0
          %750 = vmatprep.subr.bf16.mxu0 0
          %751 = vmatpush1.bf16.msra.mxu0 0
          %752 = vmatprep.subr.bf16.mxu0 0
          %753 = vmatpush1.bf16.msra.mxu0 0
          %754 = vmatprep.subr.bf16.mxu0 0
          %755 = vmatpush1.bf16.msra.mxu0 0
          %756 = vmatprep.subr.bf16.mxu0 0
          %757 = vmatpush1.bf16.msra.mxu0 0
          %758 = vmatprep.mubr.bf16.mxu0 0
          %759 = vmatmul.mubr.bf16.gmra.mrb[0].mxu0 %v654
          %v760 = vpop.f32.mrb[0].mxu0
          %v761 = vadd.f32 %v676, %v760
          %v762 = vpop.f32.mrb[0].mxu0
          %v763 = vpop.f32.mrb[0].mxu0
          %v764 = vpop.f32.mrb[0].mxu0
          %765 = vdwg.mxu0
          %766 = vst [vmem:[#allocation10] sm:$0xff] %v761
        $region72: #{tpu_custom_call.1} parent=43 // pred_fallthru
          _
        // Predicated region
        $region73: #{tpu_custom_call.1} parent=43 // pred_check
          %p767 = pneg %p183
        $region74: #{tpu_custom_call.1} parent=43 // pred_check_branch
          %769 = sbr.rel (%p767) target = $region76
        $region75: #{tpu_custom_call.1} parent=43 // pred_region
          %s771 = ssub.s32 128, 128
          %772 = vsyncadd [#allocation5], %s771
          %s774 = sshll.u32 [#allocation10], 4
          %s775 = int_to_ptr.vmem [resolvable:$true] %s774
          %777 = dma.vmem_to_hbm [thread:$0]  %s775, 128, %s6, [#allocation5]
        $region76: #{tpu_custom_call.1} parent=43 // pred_fallthru
          _
        // Predicated region
        $region77: #{tpu_custom_call.1} parent=43 // pred_check
          %p778 = pneg %p183
        $region78: #{tpu_custom_call.1} parent=43 // pred_check_branch
          %780 = sbr.rel (%p778) target = $region80
        $region79: #{tpu_custom_call.1} parent=43 // pred_region
          %781 = dma.done [#allocation5], 128
        $region80: #{tpu_custom_call.1} parent=43 // pred_fallthru
          _
      $region44: #{tpu_custom_call.1} parent=5 // pred_fallthru
        _
      %p782 = scmp.le.s32.totalorder 2, %s15
      // Predicated region
      $region81: #{tpu_custom_call.1} parent=5 // pred_check
        %p783 = pneg %p782
      $region82: #{tpu_custom_call.1} parent=5 // pred_check_branch
        %785 = sbr.rel (%p783) target = $region84
      $region83: #{tpu_custom_call.1} parent=5 // pred_region
        %s786 = ssub.s32 %s15, 2
      $region84: #{tpu_custom_call.1} parent=5 // pred_fallthru
        _
    $region6: #{tpu_custom_call.1} parent=1 // loop_footer
      %s19 = sadd.s32 1, %s15
    $region7: #{tpu_custom_call.1} parent=1 // loop_footer_branch
      %14 = sbr.rel target = $region3
    $region8: #{tpu_custom_call.1} parent=1 // loop_exit
      _
    %787 = vsyncpa [#allocation4], 1
    %s788 = scalar_lea.sflag [#allocation4], 1
    %789 = vsyncpa %s788, 1
    %790 = vsyncpa [#allocation7], 1
    %791 = vsyncpa [#allocation5], 1
    %s792 = scalar_lea.sflag [#allocation5], 1
    %793 = vsyncpa %s792, 1

</llo_original>
